<compile_context>
chip_gen: v7x
topology: tpu7x:2x2x1
jax: 0.10.0
libtpu: 0.0.40
codegen_flags: <defaults>
</compile_context>

<pallas_src>
import functools

import jax
import jax.numpy as jnp
from jax.experimental import pallas as pl
from jax.experimental.pallas import tpu as pltpu

_LANE = 128
_ACC_ROWS = 8  # one f32 vreg = (8, 128)


def _partial_fold(sq):
    """Fold (rows, 128) f32 -> (8, 128) with VPU-only adds over the leading dim."""
    r = sq.shape[0]
    if r == _ACC_ROWS:
        return sq
    return sq.reshape(r // _ACC_ROWS, _ACC_ROWS, _LANE).sum(axis=0)


def _content_loss_single_kernel(x_ref, t_ref, loss_ref):
    # Whole (rows, 128) slab resident in VMEM; one shot, no grid bookkeeping.
    d = (x_ref[...] - t_ref[...]).astype(jnp.float32)
    sq = d * d
    r = sq.shape[0]
    if r > _ACC_ROWS and r % _ACC_ROWS == 0:
        # Two-stage reduce: VPU fold to one vreg, then a single small XLU reduce.
        sq = _partial_fold(sq)
    loss_ref[...] = jnp.sum(sq, keepdims=True)


def _content_loss_grid_kernel(x_ref, t_ref, loss_ref, acc_ref, *,
                              tile_rows, total_rows, mask_last):
    step = pl.program_id(0)

    @pl.when(step == 0)
    def _():
        acc_ref[...] = jnp.zeros_like(acc_ref)

    d = (x_ref[...] - t_ref[...]).astype(jnp.float32)
    if mask_last:
        # Grid covers cdiv(rows, tile_rows); the final block extends past the
        # array and its tail of the VMEM buffer holds stale/undefined data.
        # Zero it out before squaring (total_rows / tile_rows are static).
        row_idx = jax.lax.broadcasted_iota(jnp.int32, (tile_rows, _LANE), 0)
        valid = row_idx < (total_rows - step * tile_rows)
        d = jnp.where(valid, d, 0.0)
    # VPU-only fold into a single (8,128) vreg accumulator: no full-tile
    # accumulator load/store, 4 KiB scratch total.
    acc_ref[...] += _partial_fold(d * d)

    @pl.when(step == pl.num_programs(0) - 1)
    def _():
        # Single XLU reduction over just 1024 elements, once per call.
        loss_ref[...] = jnp.sum(acc_ref[...], keepdims=True)


def _default_max_tile_rows():
    """Generation-aware tile cap: amortize ~0.35 us/step against HBM bandwidth
    while staying inside each chip's scoped-VMEM budget."""
    try:
        kind = jax.devices()[0].device_kind.lower()
    except Exception:
        return 2048
    if "v5e" in kind or "v5 lite" in kind or "v5lite" in kind:
        return 2048   # ~1 MiB/input tile; fits v5e's 16 MiB scoped default
    if "v6" in kind:
        return 4096   # ~2 MiB/input tile @ ~1.4 TB/s HBM
    if "7" in kind:
        return 8192   # ~4 MiB/input tile @ ~3.2 TB/s HBM (64 MiB physical VMEM)
    return 2048       # conservative default for other generations


def _pick_tile_rows(rows, max_tile_rows, sub):
    """Choose tile rows (multiple of `sub`) for the gridded path.

    Prefers an exact divisor of `rows` in [512, max_tile_rows] (no edge mask);
    otherwise returns the largest aligned tile and lets the kernel mask the
    final partial block (no jnp.pad / extra HBM traffic)."""
    max_tile = max(sub, (int(max_tile_rows) // sub) * sub)
    min_tile = min(max_tile, 512)  # never collapse to pathological tiny tiles
    for tr in range(max_tile, min_tile - 1, -sub):
        if rows % tr == 0:
            return tr, False
    return max_tile, True


def content_loss(x, target, *, max_tile_rows=None):
    """Returns (input_passthrough, mse_loss_scalar) matching ContentLoss.forward."""
    assert x.shape == target.shape, (x.shape, target.shape)
    n_elem = x.size
    if max_tile_rows is None:
        max_tile_rows = _default_max_tile_rows()

    # Flatten to (rows, 128) so the last dim is lane-dense. Keep the original
    # dtype through the DMA (bf16 inputs stay bf16; kernel casts to f32).
    xf = x.reshape(-1)
    tf = target.reshape(-1)
    pad = (-n_elem) % _LANE
    if pad:
        # Rare correctness fallback (element count not a multiple of 128):
        # zero-pad both sides, padded elements contribute exactly 0.
        xf = jnp.pad(xf, (0, pad))
        tf = jnp.pad(tf, (0, pad))
    rows = (n_elem + pad) // _LANE
    x2 = xf.reshape(rows, _LANE)
    t2 = tf.reshape(rows, _LANE)

    # Sublane packing: 8 rows for 4-byte dtypes, 16 for 2-byte, 32 for 1-byte.
    sub = {4: 8, 2: 16, 1: 32}.get(jnp.dtype(x2.dtype).itemsize, 8)
    max_tile_rows = max(sub, (int(max_tile_rows) // sub) * sub)

    if rows <= max_tile_rows:
        # Small input: single invocation, no grid, no accumulator scratch.
        loss2d = pl.pallas_call(
            _content_loss_single_kernel,
            out_shape=jax.ShapeDtypeStruct((1, 1), jnp.float32),
        )(x2, t2)
    else:
        tile_rows, mask_last = _pick_tile_rows(rows, max_tile_rows, sub)
        grid = (pl.cdiv(rows, tile_rows),)

        kern = functools.partial(
            _content_loss_grid_kernel,
            tile_rows=tile_rows, total_rows=rows, mask_last=mask_last)

        # Scoped VMEM sized from the chosen tile: 2 inputs x 2 buffers + acc,
        # with headroom; clamped to stay under v7x's 64 MiB physical VMEM.
        tile_bytes = tile_rows * _LANE * jnp.dtype(x2.dtype).itemsize
        vmem_limit = int(min(max(4 * tile_bytes + (6 << 20), 32 << 20), 64 << 20))

        loss2d = pl.pallas_call(
            kern,
            out_shape=jax.ShapeDtypeStruct((1, 1), jnp.float32),
            grid_spec=pltpu.PrefetchScalarGridSpec(
                num_scalar_prefetch=0,
                grid=grid,
                in_specs=[
                    pl.BlockSpec((tile_rows, _LANE), lambda i: (i, 0)),
                    pl.BlockSpec((tile_rows, _LANE), lambda i: (i, 0)),
                ],
                out_specs=pl.BlockSpec((1, 1), lambda i: (0, 0)),
                # Vreg-sized accumulator (4 KiB) instead of a tile-shaped one.
                scratch_shapes=[pltpu.VMEM((_ACC_ROWS, _LANE), jnp.float32)],
            ),
            compiler_params=pltpu.CompilerParams(
                dimension_semantics=("arbitrary",),
                vmem_limit_bytes=vmem_limit,
            ),
        )(x2, t2)

    # Single divide by the TRUE element count (any padding contributed zero).
    loss = loss2d[0, 0] / float(n_elem)
    # Pass-through: return the input unchanged, no copy materialized.
    # TODO(synk): nn.Module stores the loss on `self.loss`; here it is returned
    # as a second output instead of mutating module state.
    return x, loss


if __name__ == "__main__":
    key = jax.random.PRNGKey(0)
    k = jax.random.split(key, 8)

    def ref_mse(a, b):
        return jnp.mean((a.astype(jnp.float32) - b.astype(jnp.float32)) ** 2)

    # 1) NCHW feature maps, small shapes (typical conv features) -> single-shot path.
    x = jax.random.normal(k[0], (2, 4, 16, 16), dtype=jnp.float32)
    t = jax.random.normal(k[1], (2, 4, 16, 16), dtype=jnp.float32)  # stand-in for target.detach()
    y, loss = content_loss(x, t)
    jax.block_until_ready((y, loss))
    assert y is x, "pass-through must return the input unchanged"
    assert jnp.allclose(loss, ref_mse(x, t), rtol=1e-5, atol=1e-6), (loss, ref_mse(x, t))

    # 2) Gridded path, exact-divisor tiles (forces grid=(4,)).
    xb = jax.random.normal(k[2], (2, 4, 64, 64), dtype=jnp.float32)
    tb = jax.random.normal(k[3], (2, 4, 64, 64), dtype=jnp.float32)
    yb, loss_b = content_loss(xb, tb, max_tile_rows=64)
    jax.block_until_ready((yb, loss_b))
    assert yb is xb
    assert jnp.allclose(loss_b, ref_mse(xb, tb), rtol=1e-5, atol=1e-6), (loss_b, ref_mse(xb, tb))

    # 3) Gridded path with a masked partial last tile (136 rows, tile=64 -> grid=3).
    xc = jax.random.normal(k[4], (2, 68, 128), dtype=jnp.float32)
    tc = jax.random.normal(k[5], (2, 68, 128), dtype=jnp.float32)
    yc, loss_c = content_loss(xc, tc, max_tile_rows=64)
    jax.block_until_ready((yc, loss_c))
    assert yc is xc
    assert jnp.allclose(loss_c, ref_mse(xc, tc), rtol=1e-5, atol=1e-6), (loss_c, ref_mse(xc, tc))

    # 4) bf16 inputs stay bf16 through the DMA; f32 accumulation in-kernel.
    xd = jax.random.normal(k[6], (2, 4, 64, 64), dtype=jnp.bfloat16)
    td = jax.random.normal(k[7], (2, 4, 64, 64), dtype=jnp.bfloat16)
    yd, loss_d = content_loss(xd, td, max_tile_rows=64)
    jax.block_until_ready((yd, loss_d))
    assert yd is xd
    assert jnp.allclose(loss_d, ref_mse(xd, td), rtol=1e-4, atol=1e-5), (loss_d, ref_mse(xd, td))

    # 5) Element count not a multiple of 128 (lane-pad correctness fallback).
    xe = jax.random.normal(k[0], (3, 5, 7), dtype=jnp.float32)
    te = jax.random.normal(k[1], (3, 5, 7), dtype=jnp.float32)
    ye, loss_e = content_loss(xe, te)
    jax.block_until_ready((ye, loss_e))
    assert ye is xe
    assert jnp.allclose(loss_e, ref_mse(xe, te), rtol=1e-5, atol=1e-6), (loss_e, ref_mse(xe, te))

    print("KERNEL_OK")
</pallas_src>

<mosaic_0001>
module attributes {stable_mosaic.version = 11 : i64} {
  func.func @_content_loss_single_kernel(%arg0: memref<16x128xf32, #tpu.memory_space<vmem>>, %arg1: memref<16x128xf32, #tpu.memory_space<vmem>>, %arg2: memref<1x1xf32, #tpu.memory_space<vmem>>) attributes {dimension_semantics = [], scalar_prefetch = 0 : i64, scratch_operands = 0 : i64, tpu.core_type = #tpu.core_type<tc>} {
    %c0 = arith.constant 0 : index
    %c0_0 = arith.constant 0 : index
    %0 = vector.load %arg0[%c0, %c0_0] : memref<16x128xf32, #tpu.memory_space<vmem>>, vector<16x128xf32>
    %c0_1 = arith.constant 0 : index
    %c0_2 = arith.constant 0 : index
    %1 = vector.load %arg1[%c0_1, %c0_2] : memref<16x128xf32, #tpu.memory_space<vmem>>, vector<16x128xf32>
    %2 = arith.subf %0, %1 : vector<16x128xf32>
    %3 = arith.mulf %2, %2 : vector<16x128xf32>
    %4 = vector.shape_cast %3 : vector<16x128xf32> to vector<2x8x128xf32>
    %cst = arith.constant dense<0.000000e+00> : vector<8x128xf32>
    %5 = vector.multi_reduction <add>, %4, %cst [0] : vector<2x8x128xf32> to vector<8x128xf32>
    %6 = vector.shape_cast %5 : vector<8x128xf32> to vector<1x8x128xf32>
    %cst_3 = arith.constant dense<0.000000e+00> : vector<1xf32>
    %7 = vector.multi_reduction <add>, %6, %cst_3 [1, 2] : vector<1x8x128xf32> to vector<1xf32>
    %8 = vector.shape_cast %7 : vector<1xf32> to vector<1x1x1xf32>
    %9 = vector.extract %8[0, 0, 0] : f32 from vector<1x1x1xf32>
    %10 = vector.broadcast %9 : f32 to vector<1x1xf32>
    %c0_4 = arith.constant 0 : index
    %c0_5 = arith.constant 0 : index
    %11 = vector.load %arg2[%c0_4, %c0_5] : memref<1x1xf32, #tpu.memory_space<vmem>>, vector<1x1xf32>
    tpu.vector_store %arg2[%c0_4, %c0_5], %10 {strides = array<i32>} : memref<1x1xf32, #tpu.memory_space<vmem>>, vector<1x1xf32>,
    return
  }
}

</mosaic_0001>

<llo_original>
// kernel: tpu_custom_call.1
$region0: #{tpu_custom_call.1}
  #allocation0 [shape = 'u32[]', space=smem, size = 0x4, offset = 0x4, fixed_abs, tag = 'smem constant byte address 0x4 - core index']
  #allocation1 [shape = 'u32[144,128]{1,0:T(1,128)}', space=vmem, size = 0x12000, scoped, tag = 'internal scratch']
  %s0 = inlined_call_operand.hbm [shape: f32[16,128], index: 0, kind: input, shape index: {}]
  %s1 = inlined_call_operand.hbm [shape: f32[16,128], index: 1, kind: input, shape index: {}]
  %s2 = inlined_call_operand.hbm [shape: f32[1,1], index: 2, kind: output, shape index: {}]
  %s3 = sld [smem:[#allocation0]]
  $region26: #{tpu_custom_call.1} parent=0
    _
  %s5 = ssub.s32 1, %s3
  %s6 = scalar_select 0, %s5, %s3
  $region1: #{tpu_custom_call.1} parent=0
    #allocation2 [shape = 'u8[8192]{0}', space=vmem, size = 0x2000, scoped, tag = 'input window, operand 0, single buffered']
    #allocation3 [shape = 's32[1]{0}', space=sflag, size = 0x4, scoped, tag = 'scoped memory for tpu_custom_call.1']
    #allocation4 [shape = 's32[1]{0}', space=sflag, size = 0x4, scoped, tag = 'scoped memory for tpu_custom_call.1']
    #allocation5 [shape = 'u8[8192]{0}', space=vmem, size = 0x2000, scoped, tag = 'input window, operand 1, single buffered']
    #allocation6 [shape = 's32[1]{0}', space=sflag, size = 0x4, scoped, tag = 'scoped memory for tpu_custom_call.1']
    #allocation7 [shape = 'u8[512]{0}', space=vmem, size = 0x400, scoped, tag = 'output window, operand 0, single buffered']
    %7 = vsyncpa [#allocation3], 0
    %8 = vsyncpa [#allocation6], 0
    %9 = vsyncpa [#allocation4], 0
    // Predicated region
    $region2: #{tpu_custom_call.1} parent=1 // pred_check
      _
    $region3: #{tpu_custom_call.1} parent=1 // pred_check_branch
      %11 = sbr.rel (0) target = $region5
    $region4: #{tpu_custom_call.1} parent=1 // pred_region
      %s13 = ssub.s32 256, 256
      %14 = vsyncadd [#allocation3], %s13
      %s15 = sshll.u32 [#allocation2], 4
      %s16 = int_to_ptr.vmem [resolvable:$true] %s15
      %21 = dma.hbm_to_vmem [thread:$0]  %s0, 256, %s16, [#allocation3], 128, 128, 8
    $region5: #{tpu_custom_call.1} parent=1 // pred_fallthru
      _
    // Predicated region
    $region6: #{tpu_custom_call.1} parent=1 // pred_check
      _
    $region7: #{tpu_custom_call.1} parent=1 // pred_check_branch
      %23 = sbr.rel (0) target = $region9
    $region8: #{tpu_custom_call.1} parent=1 // pred_region
      %s25 = ssub.s32 256, 256
      %26 = vsyncadd [#allocation6], %s25
      %s27 = sshll.u32 [#allocation5], 4
      %s28 = int_to_ptr.vmem [resolvable:$true] %s27
      %33 = dma.hbm_to_vmem [thread:$0]  %s1, 256, %s28, [#allocation6], 128, 128, 8
    $region9: #{tpu_custom_call.1} parent=1 // pred_fallthru
      _
    // Predicated region
    $region10: #{tpu_custom_call.1} parent=1 // pred_check
      _
    $region11: #{tpu_custom_call.1} parent=1 // pred_check_branch
      %35 = sbr.rel (0) target = $region13
    $region12: #{tpu_custom_call.1} parent=1 // pred_region
      %36 = dma.done [#allocation3], 256
    $region13: #{tpu_custom_call.1} parent=1 // pred_fallthru
      _
    // Predicated region
    $region14: #{tpu_custom_call.1} parent=1 // pred_check
      _
    $region15: #{tpu_custom_call.1} parent=1 // pred_check_branch
      %38 = sbr.rel (0) target = $region17
    $region16: #{tpu_custom_call.1} parent=1 // pred_region
      %39 = dma.done [#allocation6], 256
    $region17: #{tpu_custom_call.1} parent=1 // pred_fallthru
      _
    %v40 = vld [vmem:[#allocation2] sm:$0xff]
    %v41 = vld [vmem:[#allocation2 + $0x8] sm:$0xff]
    %v42 = vld [vmem:[#allocation5] sm:$0xff]
    %v43 = vld [vmem:[#allocation5 + $0x8] sm:$0xff]
    %v44 = vsub.f32 %v40, %v42
    %v45 = vsub.f32 %v41, %v43
    %v46 = vmul.f32 %v44, %v44
    %v47 = vmul.f32 %v45, %v45
    %v48 = vadd.f32 %v46, %v47
    %49 = vadd.xlane.f32.xlu0 %v48
    %v50 = vpop.xlane.xlu0 %49
    %v51 = vrot.slane %v50, 4
    %v52 = vadd.f32 %v50, %v51
    %v53 = vrot.slane %v52, 2
    %v54 = vadd.f32 %v52, %v53
    %v55 = vrot.slane %v54, 1
    %v56 = vadd.f32 %v54, %v55
    %s57 = vtos %v56
    %v58 = vstv %s57
    %vm59 = vcmask 0
    %60 = vst.msk [vmem:[#allocation7] sm:$0x1] %vm59, %v58
    // Predicated region
    $region18: #{tpu_custom_call.1} parent=1 // pred_check
      _
    $region19: #{tpu_custom_call.1} parent=1 // pred_check_branch
      %62 = sbr.rel (0) target = $region21
    $region20: #{tpu_custom_call.1} parent=1 // pred_region
      %s64 = ssub.s32 16, 16
      %65 = vsyncadd [#allocation4], %s64
      %s67 = sshll.u32 [#allocation7], 4
      %s68 = int_to_ptr.vmem [resolvable:$true] %s67
      %70 = dma.vmem_to_hbm [thread:$0]  %s68, 16, %s2, [#allocation4]
    $region21: #{tpu_custom_call.1} parent=1 // pred_fallthru
      _
    // Predicated region
    $region22: #{tpu_custom_call.1} parent=1 // pred_check
      _
    $region23: #{tpu_custom_call.1} parent=1 // pred_check_branch
      %72 = sbr.rel (0) target = $region25
    $region24: #{tpu_custom_call.1} parent=1 // pred_region
      %73 = dma.done [#allocation4], 16
    $region25: #{tpu_custom_call.1} parent=1 // pred_fallthru
      _
    %74 = vsyncpa [#allocation3], 1
    %75 = vsyncpa [#allocation6], 1
    %76 = vsyncpa [#allocation4], 1

</llo_original>
